<compile_context>
chip_gen: v6e
topology: v6e:2x2x1
jax: 0.10.0
libtpu: 0.0.40
codegen_flags: <defaults>
</compile_context>

<pallas_src>
import jax
import jax.numpy as jnp
from jax.experimental import pallas as pl
from jax.experimental.pallas import tpu as pltpu

EMBEDDING_SIZE = 64
FFN_HIDDEN_SIZE = 8
HIDDEN = EMBEDDING_SIZE * FFN_HIDDEN_SIZE  # 512
NEG_SLOPE = 0.01


def _round_up(x, m):
    return (x + m - 1) // m * m


def ffn_kernel(x_ref, w1_ref, b1_ref, w2_ref, b2_ref, o_ref):
    # x_ref: (TM, E) f32    w1_ref: (E, H) bf16   b1_ref: (1, H) f32
    # w2_ref: (H, E) bf16   b2_ref: (1, E) f32    o_ref: (TM, E) f32
    # In-kernel activation cast: VPU work hidden under the MXU, and x's HBM
    # read is a single f32 pass (no separate wrapper-side cast kernel).
    x_bf16 = x_ref[...].astype(jnp.bfloat16)
    # First linear: bf16 MXU, f32 accumulation.
    h = jnp.dot(x_bf16, w1_ref[...], preferred_element_type=jnp.float32)
    h = h + b1_ref[...]
    # LeakyReLU(0.01) in f32 (portable incl. v5e, which has no bf16 VPU).
    h = jnp.where(h >= 0, h, NEG_SLOPE * h)
    # Second linear: bf16 MXU, f32 accumulation.
    y = jnp.dot(h.astype(jnp.bfloat16), w2_ref[...],
                preferred_element_type=jnp.float32)
    o_ref[...] = (y + b2_ref[...]).astype(o_ref.dtype)


def transformer_feed_forward(x, w1, b1, w2, b2, *, block_rows=4096):
    """x: (B, T, E) float32. w1: (E, H), b1: (H,), w2: (H, E), b2: (E,)."""
    B, T, E = x.shape
    assert E == EMBEDDING_SIZE
    M = B * T

    # Row tile: multiple of 16 (sublane-aligned), capped at block_rows and at
    # ~half of M (so the grid has >= 2 steps whenever M spans more than one
    # minimum tile -> both v7x TensorCores get work).
    block_rows = max(16, (block_rows // 16) * 16)
    half_m = _round_up(pl.cdiv(M, 2), 16)
    TM = max(16, min(block_rows, half_m, _round_up(M, 16)))
    grid = (pl.cdiv(M, TM),)   # ragged last block handled/masked by Pallas

    x2d = x.reshape(M, E)      # f32; no wrapper-side cast or pad pass over x

    # One-time (tiny) weight/bias prep in the wrapper.
    w1_bf16 = w1.astype(jnp.bfloat16)
    w2_bf16 = w2.astype(jnp.bfloat16)
    b1_2d = b1.reshape(1, HIDDEN).astype(jnp.float32)
    b2_2d = b2.reshape(1, E).astype(jnp.float32)

    flops = 2 * M * (E * HIDDEN + HIDDEN * E)
    bytes_accessed = (M * E * 4                       # x in (f32)
                      + M * E * 4                     # y out (f32)
                      + (E * HIDDEN + HIDDEN * E) * 2  # weights (bf16)
                      + (HIDDEN + E) * 4)              # biases (f32)

    out2d = pl.pallas_call(
        ffn_kernel,
        out_shape=jax.ShapeDtypeStruct((M, E), x.dtype),
        grid=grid,
        in_specs=[
            pl.BlockSpec((TM, E), lambda i: (i, 0)),       # x tile (pipelined)
            pl.BlockSpec((E, HIDDEN), lambda i: (0, 0)),   # w1 (resident)
            pl.BlockSpec((1, HIDDEN), lambda i: (0, 0)),   # b1 (resident)
            pl.BlockSpec((HIDDEN, E), lambda i: (0, 0)),   # w2 (resident)
            pl.BlockSpec((1, E), lambda i: (0, 0)),        # b2 (resident)
        ],
        out_specs=pl.BlockSpec((TM, E), lambda i: (i, 0)),
        compiler_params=pltpu.CompilerParams(
            dimension_semantics=("parallel",),
            vmem_limit_bytes=48 * 1024 * 1024,
        ),
        cost_estimate=pl.CostEstimate(
            flops=flops, transcendentals=0, bytes_accessed=bytes_accessed),
    )(x2d, w1_bf16, b1_2d, w2_bf16, b2_2d)

    return out2d.reshape(B, T, E)


def init_params(key):
    """Deterministic init mimicking torch nn.Linear (uniform ±1/sqrt(fan_in))."""
    k1, k2, k3, k4 = jax.random.split(key, 4)
    bound1 = 1.0 / (EMBEDDING_SIZE ** 0.5)
    bound2 = 1.0 / (HIDDEN ** 0.5)
    w1 = jax.random.uniform(k1, (EMBEDDING_SIZE, HIDDEN), jnp.float32,
                            -bound1, bound1)
    b1 = jax.random.uniform(k2, (HIDDEN,), jnp.float32, -bound1, bound1)
    w2 = jax.random.uniform(k3, (HIDDEN, EMBEDDING_SIZE), jnp.float32,
                            -bound2, bound2)
    b2 = jax.random.uniform(k4, (EMBEDDING_SIZE,), jnp.float32, -bound2, bound2)
    return w1, b1, w2, b2


def _reference(x, w1, b1, w2, b2):
    """Pure-JAX f32 reference (same math as the torch Sequential)."""
    h = x.reshape(-1, EMBEDDING_SIZE) @ w1 + b1
    h = jnp.where(h >= 0, h, NEG_SLOPE * h)
    return (h @ w2 + b2).reshape(x.shape)


if __name__ == "__main__":
    key = jax.random.PRNGKey(0)
    kx, kx2, kx3, kp = jax.random.split(key, 4)

    w1, b1, w2, b2 = init_params(kp)

    # Small shape consistent with the module: batch=2, seq=8, embed=64.
    B, T = 2, 8
    x = jax.random.normal(kx, (B, T, EMBEDDING_SIZE), jnp.float32)
    out = jax.block_until_ready(transformer_feed_forward(x, w1, b1, w2, b2))
    assert out.shape == (B, T, EMBEDDING_SIZE)
    # bf16 MXU operands + bf16 hidden re-cast -> loosened tolerance vs f32 ref.
    ref = _reference(x, w1, b1, w2, b2)
    assert jnp.allclose(out, ref, atol=2e-2, rtol=2e-2)

    # Multi-tile + ragged last block via cdiv grid (no jnp.pad):
    # M=40, TM=16 -> grid=(3,), last block masked.
    B2, T2 = 2, 20
    x2 = jax.random.normal(kx2, (B2, T2, EMBEDDING_SIZE), jnp.float32)
    out2 = jax.block_until_ready(
        transformer_feed_forward(x2, w1, b1, w2, b2, block_rows=16))
    ref2 = _reference(x2, w1, b1, w2, b2)
    assert out2.shape == (B2, T2, EMBEDDING_SIZE)
    assert jnp.allclose(out2, ref2, atol=2e-2, rtol=2e-2)

    # Default block_rows with the >=2-step split + ragged tail:
    # M=60 -> TM=32, grid=(2,).
    B3, T3 = 3, 20
    x3 = jax.random.normal(kx3, (B3, T3, EMBEDDING_SIZE), jnp.float32)
    out3 = jax.block_until_ready(transformer_feed_forward(x3, w1, b1, w2, b2))
    ref3 = _reference(x3, w1, b1, w2, b2)
    assert out3.shape == (B3, T3, EMBEDDING_SIZE)
    assert jnp.allclose(out3, ref3, atol=2e-2, rtol=2e-2)

    print("KERNEL_OK")
</pallas_src>

<mosaic_0001>
module attributes {stable_mosaic.version = 11 : i64} {
  func.func @ffn_kernel(%arg0: i32, %arg1: memref<16x64xf32, #tpu.memory_space<vmem>>, %arg2: memref<64x512xbf16, #tpu.memory_space<vmem>>, %arg3: memref<1x512xf32, #tpu.memory_space<vmem>>, %arg4: memref<512x64xbf16, #tpu.memory_space<vmem>>, %arg5: memref<1x64xf32, #tpu.memory_space<vmem>>, %arg6: memref<16x64xf32, #tpu.memory_space<vmem>>) attributes {dimension_semantics = [#tpu.dimension_semantics<parallel>], iteration_bounds = array<i64: 1>, scalar_prefetch = 0 : i64, scratch_operands = 0 : i64, tpu.core_type = #tpu.core_type<tc>, window_params = [{transform_indices = @transform_0, window_bounds = array<i64: 16, 64>}, {pipeline_mode = #tpu.pipeline_mode<synchronous>, transform_indices = @transform_1, window_bounds = array<i64: 64, 512>}, {pipeline_mode = #tpu.pipeline_mode<synchronous>, transform_indices = @transform_2, window_bounds = array<i64: 1, 512>}, {pipeline_mode = #tpu.pipeline_mode<synchronous>, transform_indices = @transform_3, window_bounds = array<i64: 512, 64>}, {pipeline_mode = #tpu.pipeline_mode<synchronous>, transform_indices = @transform_4, window_bounds = array<i64: 1, 64>}, {transform_indices = @transform_5, window_bounds = array<i64: 16, 64>}]} {
    %c0 = arith.constant 0 : index
    %c0_0 = arith.constant 0 : index
    %0 = vector.load %arg1[%c0, %c0_0] : memref<16x64xf32, #tpu.memory_space<vmem>>, vector<16x64xf32>
    %1 = arith.truncf %0 : vector<16x64xf32> to vector<16x64xbf16>
    %c0_1 = arith.constant 0 : index
    %c0_2 = arith.constant 0 : index
    %2 = vector.load %arg2[%c0_1, %c0_2] : memref<64x512xbf16, #tpu.memory_space<vmem>>, vector<64x512xbf16>
    %cst = arith.constant dense<0.000000e+00> : vector<16x512xf32>
    %3 = tpu.matmul %1, %2, %cst {dimension_numbers = #tpu.dot_dimension_numbers<[1], [0], [0], [1], [0, 0, 1, 1], [], []>} : vector<16x64xbf16>, vector<64x512xbf16>, vector<16x512xf32> -> vector<16x512xf32>
    %c0_3 = arith.constant 0 : index
    %c0_4 = arith.constant 0 : index
    %4 = vector.load %arg3[%c0_3, %c0_4] : memref<1x512xf32, #tpu.memory_space<vmem>>, vector<1x512xf32>
    %5 = vector.broadcast %4 : vector<1x512xf32> to vector<16x512xf32>
    %6 = arith.addf %3, %5 : vector<16x512xf32>
    %cst_5 = arith.constant 0.000000e+00 : f32
    %7 = vector.broadcast %cst_5 : f32 to vector<16x512xf32>
    %8 = arith.cmpf oge, %6, %7 : vector<16x512xf32>
    %cst_6 = arith.constant 0.00999999977 : f32
    %9 = vector.broadcast %cst_6 : f32 to vector<16x512xf32>
    %10 = arith.mulf %9, %6 : vector<16x512xf32>
    %11 = arith.select %8, %6, %10 : vector<16x512xi1>, vector<16x512xf32>
    %12 = arith.truncf %11 : vector<16x512xf32> to vector<16x512xbf16>
    %c0_7 = arith.constant 0 : index
    %c0_8 = arith.constant 0 : index
    %13 = vector.load %arg4[%c0_7, %c0_8] : memref<512x64xbf16, #tpu.memory_space<vmem>>, vector<512x64xbf16>
    %cst_9 = arith.constant dense<0.000000e+00> : vector<16x64xf32>
    %14 = tpu.matmul %12, %13, %cst_9 {dimension_numbers = #tpu.dot_dimension_numbers<[1], [0], [0], [1], [0, 0, 1, 1], [], []>} : vector<16x512xbf16>, vector<512x64xbf16>, vector<16x64xf32> -> vector<16x64xf32>
    %c0_10 = arith.constant 0 : index
    %c0_11 = arith.constant 0 : index
    %15 = vector.load %arg5[%c0_10, %c0_11] : memref<1x64xf32, #tpu.memory_space<vmem>>, vector<1x64xf32>
    %16 = vector.broadcast %15 : vector<1x64xf32> to vector<16x64xf32>
    %17 = arith.addf %14, %16 : vector<16x64xf32>
    %c0_12 = arith.constant 0 : index
    %c0_13 = arith.constant 0 : index
    %18 = vector.load %arg6[%c0_12, %c0_13] : memref<16x64xf32, #tpu.memory_space<vmem>>, vector<16x64xf32>
    tpu.vector_store %arg6[%c0_12, %c0_13], %17 {strides = array<i32>} : memref<16x64xf32, #tpu.memory_space<vmem>>, vector<16x64xf32>,
    return
  }
  func.func @transform_0(%arg0: i32) -> (i32, i32) {
    %c0_i32 = arith.constant 0 : i32
    %c0_i32_0 = arith.constant 0 : i32
    return %arg0, %c0_i32 : i32, i32
  }
  func.func @transform_1(%arg0: i32) -> (i32, i32) {
    %c0_i32 = arith.constant 0 : i32
    %c0_i32_0 = arith.constant 0 : i32
    %c0_i32_1 = arith.constant 0 : i32
    return %c0_i32, %c0_i32_0 : i32, i32
  }
  func.func @transform_2(%arg0: i32) -> (i32, i32) {
    %c0_i32 = arith.constant 0 : i32
    %c0_i32_0 = arith.constant 0 : i32
    %c0_i32_1 = arith.constant 0 : i32
    return %c0_i32, %c0_i32_0 : i32, i32
  }
  func.func @transform_3(%arg0: i32) -> (i32, i32) {
    %c0_i32 = arith.constant 0 : i32
    %c0_i32_0 = arith.constant 0 : i32
    %c0_i32_1 = arith.constant 0 : i32
    return %c0_i32, %c0_i32_0 : i32, i32
  }
  func.func @transform_4(%arg0: i32) -> (i32, i32) {
    %c0_i32 = arith.constant 0 : i32
    %c0_i32_0 = arith.constant 0 : i32
    %c0_i32_1 = arith.constant 0 : i32
    return %c0_i32, %c0_i32_0 : i32, i32
  }
  func.func @transform_5(%arg0: i32) -> (i32, i32) {
    %c0_i32 = arith.constant 0 : i32
    %c0_i32_0 = arith.constant 0 : i32
    return %arg0, %c0_i32 : i32, i32
  }
}

</mosaic_0001>

<llo_original>
// kernel: tpu_custom_call.1
$region0: #{tpu_custom_call.1}
  #allocation0 [shape = 'u32[]', space=smem, size = 0x4, offset = 0x4, fixed_abs, tag = 'smem constant byte address 0x4 - core index']
  #allocation1 [shape = 'u32[144,128]{1,0:T(1,128)}', space=vmem, size = 0x12000, scoped, tag = 'internal scratch']
  %s0 = inlined_call_operand.vmem [shape: f32[16,64], index: 0, kind: input, shape index: {}]
  %s1 = inlined_call_operand.vmem [shape: bf16[64,512], index: 1, kind: input, shape index: {}]
  %s2 = inlined_call_operand.vmem [shape: f32[1,512], index: 2, kind: input, shape index: {}]
  %s3 = inlined_call_operand.vmem [shape: bf16[512,64], index: 3, kind: input, shape index: {}]
  %s4 = inlined_call_operand.vmem [shape: f32[1,64], index: 4, kind: input, shape index: {}]
  %s5 = inlined_call_operand.hbm [shape: f32[16,64], index: 5, kind: output, shape index: {}]
  %s6 = sld [smem:[#allocation0]]
  $region30: #{tpu_custom_call.1} parent=0
    _
  %s8 = ssub.s32 1, %s6
  %s9 = scalar_select 0, %s8, %s6
  $region1: #{tpu_custom_call.1} parent=0
    #allocation2 [shape = 'u8[8192]{0}', space=vmem, size = 0x2000, scoped, tag = 'output window, operand 0, single buffered']
    #allocation3 [shape = 's32[1]{0}', space=sflag, size = 0x4, scoped, tag = 'scoped memory for tpu_custom_call.1']
    %10 = vsyncpa [#allocation3], 0
    // Predicated region
    $region2: #{tpu_custom_call.1} parent=1 // pred_check
      _
    $region3: #{tpu_custom_call.1} parent=1 // pred_check_branch
      %12 = sbr.rel (0) target = $region5
    $region4: #{tpu_custom_call.1} parent=1 // pred_region
      _
    $region5: #{tpu_custom_call.1} parent=1 // pred_fallthru
      _
    // Predicated region
    $region6: #{tpu_custom_call.1} parent=1 // pred_check
      _
    $region7: #{tpu_custom_call.1} parent=1 // pred_check_branch
      %14 = sbr.rel (0) target = $region9
    $region8: #{tpu_custom_call.1} parent=1 // pred_region
      _
    $region9: #{tpu_custom_call.1} parent=1 // pred_fallthru
      _
    // Predicated region
    $region10: #{tpu_custom_call.1} parent=1 // pred_check
      _
    $region11: #{tpu_custom_call.1} parent=1 // pred_check_branch
      %16 = sbr.rel (0) target = $region13
    $region12: #{tpu_custom_call.1} parent=1 // pred_region
      _
    $region13: #{tpu_custom_call.1} parent=1 // pred_fallthru
      _
    // Predicated region
    $region14: #{tpu_custom_call.1} parent=1 // pred_check
      _
    $region15: #{tpu_custom_call.1} parent=1 // pred_check_branch
      %18 = sbr.rel (0) target = $region17
    $region16: #{tpu_custom_call.1} parent=1 // pred_region
      _
    $region17: #{tpu_custom_call.1} parent=1 // pred_fallthru
      _
    // Predicated region
    $region18: #{tpu_custom_call.1} parent=1 // pred_check
      _
    $region19: #{tpu_custom_call.1} parent=1 // pred_check_branch
      %20 = sbr.rel (0) target = $region21
    $region20: #{tpu_custom_call.1} parent=1 // pred_region
      _
    $region21: #{tpu_custom_call.1} parent=1 // pred_fallthru
      _
    %v22 = vld [vmem:[%s0] sm:$0xff]
    %v23 = vld [vmem:[%s0 + $0x8] sm:$0xff]
    %v24 = vpack.c.bf16 %v23, %v22
    %v25 = vld [vmem:[%s1] sm:$0xff]
    %v26 = vld [vmem:[%s1 + $0x8] sm:$0xff]
    %v27 = vld [vmem:[%s1 + $0x10] sm:$0xff]
    %v28 = vld [vmem:[%s1 + $0x18] sm:$0xff]
    %v29 = vld [vmem:[%s1 + $0x20] sm:$0xff]
    %v30 = vld [vmem:[%s1 + $0x28] sm:$0xff]
    %v31 = vld [vmem:[%s1 + $0x30] sm:$0xff]
    %v32 = vld [vmem:[%s1 + $0x38] sm:$0xff]
    %v33 = vld [vmem:[%s1 + $0x40] sm:$0xff]
    %v34 = vld [vmem:[%s1 + $0x48] sm:$0xff]
    %v35 = vld [vmem:[%s1 + $0x50] sm:$0xff]
    %v36 = vld [vmem:[%s1 + $0x58] sm:$0xff]
    %v37 = vld [vmem:[%s1 + $0x60] sm:$0xff]
    %v38 = vld [vmem:[%s1 + $0x68] sm:$0xff]
    %v39 = vld [vmem:[%s1 + $0x70] sm:$0xff]
    %v40 = vld [vmem:[%s1 + $0x78] sm:$0xff]
    %v41 = vld [vmem:[%s2] sm:$0xf]
    %v43 = vlaneseq
    %v44 = vshrl.u32 %v43, 7
    %v45 = vsub.s32 0, %v44
    %v46 = vrot.slane %v41, %v45
    %v47 = vlaneseq
    %v48 = vshrl.u32 %v47, 7
    %v49 = vsub.s32 1, %v48
    %v50 = vrot.slane %v41, %v49
    %v51 = vlaneseq
    %v52 = vshrl.u32 %v51, 7
    %v53 = vsub.s32 2, %v52
    %v54 = vrot.slane %v41, %v53
    %v55 = vlaneseq
    %v56 = vshrl.u32 %v55, 7
    %v57 = vsub.s32 3, %v56
    %v58 = vrot.slane %v41, %v57
    %v79 = vunpack.c.l.b16 %v25
    %v80 = vunpack.c.h.b16 %v25
    %v81 = vunpack.c.l.b16 %v26
    %v82 = vunpack.c.h.b16 %v26
    %v83 = vunpack.c.l.b16 %v27
    %v84 = vunpack.c.h.b16 %v27
    %v85 = vunpack.c.l.b16 %v28
    %v86 = vunpack.c.h.b16 %v28
    %v87 = vunpack.c.l.b16 %v29
    %v88 = vunpack.c.h.b16 %v29
    %v89 = vunpack.c.l.b16 %v30
    %v90 = vunpack.c.h.b16 %v30
    %v91 = vunpack.c.l.b16 %v31
    %v92 = vunpack.c.h.b16 %v31
    %v93 = vunpack.c.l.b16 %v32
    %v94 = vunpack.c.h.b16 %v32
    %v95 = vunpack.c.l.b16 %v33
    %v96 = vunpack.c.h.b16 %v33
    %v97 = vunpack.c.l.b16 %v34
    %v98 = vunpack.c.h.b16 %v34
    %v99 = vunpack.c.l.b16 %v35
    %v100 = vunpack.c.h.b16 %v35
    %v101 = vunpack.c.l.b16 %v36
    %v102 = vunpack.c.h.b16 %v36
    %v103 = vunpack.c.l.b16 %v37
    %v104 = vunpack.c.h.b16 %v37
    %v105 = vunpack.c.l.b16 %v38
    %v106 = vunpack.c.h.b16 %v38
    %v107 = vunpack.c.l.b16 %v39
    %v108 = vunpack.c.h.b16 %v39
    %v109 = vunpack.c.l.b16 %v40
    %v110 = vunpack.c.h.b16 %v40
    %v111 = vpack.c.b16 %v83, %v79
    %v112 = vpack.c.b16 %v84, %v80
    %v113 = vpack.c.b16 %v85, %v81
    %v114 = vpack.c.b16 %v86, %v82
    %v115 = vpack.c.b16 %v91, %v87
    %v116 = vpack.c.b16 %v92, %v88
    %v117 = vpack.c.b16 %v93, %v89
    %v118 = vpack.c.b16 %v94, %v90
    %v119 = vpack.c.b16 %v99, %v95
    %v120 = vpack.c.b16 %v100, %v96
    %v121 = vpack.c.b16 %v101, %v97
    %v122 = vpack.c.b16 %v102, %v98
    %v123 = vpack.c.b16 %v107, %v103
    %v124 = vpack.c.b16 %v108, %v104
    %v125 = vpack.c.b16 %v109, %v105
    %v126 = vpack.c.b16 %v110, %v106
    %vm143 = vcmask 523264
    %v145 = vsel %vm143, %v24, 0
    %147 = vmatprep.subr.bf16.mxu0 0
    %148 = vmatpush1.bf16.msra.mxu0 0
    %149 = vmatprep.subr.bf16.mxu0 0
    %150 = vmatpush1.bf16.msra.mxu0 0
    %151 = vmatprep.subr.bf16.mxu0 0
    %152 = vmatpush1.bf16.msra.mxu0 0
    %153 = vmatprep.subr.bf16.mxu0 0
    %154 = vmatpush1.bf16.msra.mxu0 0
    %155 = vmatprep.subr.bf16.mxu0 %v124
    %156 = vmatpush1.bf16.msra.mxu0 %v123
    %157 = vmatprep.subr.bf16.mxu0 %v120
    %158 = vmatpush1.bf16.msra.mxu0 %v119
    %159 = vmatprep.subr.bf16.mxu0 %v116
    %160 = vmatpush1.bf16.msra.mxu0 %v115
    %161 = vmatprep.subr.bf16.mxu0 %v112
    %162 = vmatpush1.bf16.msra.mxu0 %v111
    %163 = vmatprep.subr.bf16.mxu0 0
    %164 = vmatpush2.bf16.msra.mxu0 0
    %165 = vmatprep.subr.bf16.mxu0 0
    %166 = vmatpush2.bf16.msra.mxu0 0
    %167 = vmatprep.subr.bf16.mxu0 0
    %168 = vmatpush2.bf16.msra.mxu0 0
    %169 = vmatprep.subr.bf16.mxu0 0
    %170 = vmatpush2.bf16.msra.mxu0 0
    %171 = vmatprep.subr.bf16.mxu0 0
    %172 = vmatpush2.bf16.msra.mxu0 0
    %173 = vmatprep.subr.bf16.mxu0 0
    %174 = vmatpush2.bf16.msra.mxu0 0
    %175 = vmatprep.subr.bf16.mxu0 0
    %176 = vmatpush2.bf16.msra.mxu0 0
    %177 = vmatprep.subr.bf16.mxu0 0
    %178 = vmatpush2.bf16.msra.mxu0 0
    %179 = vmatprep.mubr.bf16.mxu0 0
    %180 = vmatmul.mubr.bf16.gmra.mxu0 %v145
    %v181 = vpop.f32.mrf.mxu0
    %v182 = vadd.f32 %v46, %v181
    %v183 = vpop.f32.mrf.mxu0
    %v184 = vadd.f32 %v50, %v183
    %v185 = vpop.f32.mrf.mxu0
    %v186 = vadd.f32 %v46, %v185
    %v187 = vpop.f32.mrf.mxu0
    %v188 = vadd.f32 %v50, %v187
    %189 = vdwg.mxu0
    %190 = vmatprep.subr.bf16.mxu0 0
    %191 = vmatpush1.bf16.msra.mxu0 0
    %192 = vmatprep.subr.bf16.mxu0 0
    %193 = vmatpush1.bf16.msra.mxu0 0
    %194 = vmatprep.subr.bf16.mxu0 0
    %195 = vmatpush1.bf16.msra.mxu0 0
    %196 = vmatprep.subr.bf16.mxu0 0
    %197 = vmatpush1.bf16.msra.mxu0 0
    %198 = vmatprep.subr.bf16.mxu0 %v126
    %199 = vmatpush1.bf16.msra.mxu0 %v125
    %200 = vmatprep.subr.bf16.mxu0 %v122
    %201 = vmatpush1.bf16.msra.mxu0 %v121
    %202 = vmatprep.subr.bf16.mxu0 %v118
    %203 = vmatpush1.bf16.msra.mxu0 %v117
    %204 = vmatprep.subr.bf16.mxu0 %v114
    %205 = vmatpush1.bf16.msra.mxu0 %v113
    %206 = vmatprep.subr.bf16.mxu0 0
    %207 = vmatpush2.bf16.msra.mxu0 0
    %208 = vmatprep.subr.bf16.mxu0 0
    %209 = vmatpush2.bf16.msra.mxu0 0
    %210 = vmatprep.subr.bf16.mxu0 0
    %211 = vmatpush2.bf16.msra.mxu0 0
    %212 = vmatprep.subr.bf16.mxu0 0
    %213 = vmatpush2.bf16.msra.mxu0 0
    %214 = vmatprep.subr.bf16.mxu0 0
    %215 = vmatpush2.bf16.msra.mxu0 0
    %216 = vmatprep.subr.bf16.mxu0 0
    %217 = vmatpush2.bf16.msra.mxu0 0
    %218 = vmatprep.subr.bf16.mxu0 0
    %219 = vmatpush2.bf16.msra.mxu0 0
    %220 = vmatprep.subr.bf16.mxu0 0
    %221 = vmatpush2.bf16.msra.mxu0 0
    %222 = vmatprep.mubr.bf16.mxu0 0
    %223 = vmatmul.mubr.bf16.gmra.mxu0 %v145
    %v224 = vpop.f32.mrf.mxu0
    %v225 = vadd.f32 %v54, %v224
    %v226 = vpop.f32.mrf.mxu0
    %v227 = vadd.f32 %v58, %v226
    %v228 = vpop.f32.mrf.mxu0
    %v229 = vadd.f32 %v54, %v228
    %v230 = vpop.f32.mrf.mxu0
    %v231 = vadd.f32 %v58, %v230
    %232 = vdwg.mxu0
    %vm233 = vcmp.ge.f32.partialorder %v182, 0.0
    %vm234 = vcmp.ge.f32.partialorder %v184, 0.0
    %vm235 = vcmp.ge.f32.partialorder %v225, 0.0
    %vm236 = vcmp.ge.f32.partialorder %v227, 0.0
    %vm237 = vcmp.ge.f32.partialorder %v186, 0.0
    %vm238 = vcmp.ge.f32.partialorder %v188, 0.0
    %vm239 = vcmp.ge.f32.partialorder %v229, 0.0
    %vm240 = vcmp.ge.f32.partialorder %v231, 0.0
    %v241 = vmul.f32 %v182, 0.01
    %v242 = vmul.f32 %v184, 0.01
    %v243 = vmul.f32 %v225, 0.01
    %v244 = vmul.f32 %v227, 0.01
    %v245 = vmul.f32 %v186, 0.01
    %v246 = vmul.f32 %v188, 0.01
    %v247 = vmul.f32 %v229, 0.01
    %v248 = vmul.f32 %v231, 0.01
    %v249 = vsel %vm233, %v182, %v241
    %v250 = vsel %vm234, %v184, %v242
    %v251 = vsel %vm235, %v225, %v243
    %v252 = vsel %vm236, %v227, %v244
    %v253 = vsel %vm237, %v186, %v245
    %v254 = vsel %vm238, %v188, %v246
    %v255 = vsel %vm239, %v229, %v247
    %v256 = vsel %vm240, %v231, %v248
    %v257 = vpack.c.bf16 %v253, %v249
    %v258 = vpack.c.bf16 %v254, %v250
    %v259 = vpack.c.bf16 %v255, %v251
    %v260 = vpack.c.bf16 %v256, %v252
    %v261 = vld [vmem:[%s3] sm:$0xf]
    %v262 = vld [vmem:[%s3 + $0x4] sm:$0xf]
    %v263 = vld [vmem:[%s3 + $0x8] sm:$0xf]
    %v264 = vld [vmem:[%s3 + $0xc] sm:$0xf]
    %v265 = vld [vmem:[%s3 + $0x10] sm:$0xf]
    %v266 = vld [vmem:[%s3 + $0x14] sm:$0xf]
    %v267 = vld [vmem:[%s3 + $0x18] sm:$0xf]
    %v268 = vld [vmem:[%s3 + $0x1c] sm:$0xf]
    %v269 = vld [vmem:[%s3 + $0x20] sm:$0xf]
    %v270 = vld [vmem:[%s3 + $0x24] sm:$0xf]
    %v271 = vld [vmem:[%s3 + $0x28] sm:$0xf]
    %v272 = vld [vmem:[%s3 + $0x2c] sm:$0xf]
    %v273 = vld [vmem:[%s3 + $0x30] sm:$0xf]
    %v274 = vld [vmem:[%s3 + $0x34] sm:$0xf]
    %v275 = vld [vmem:[%s3 + $0x38] sm:$0xf]
    %v276 = vld [vmem:[%s3 + $0x3c] sm:$0xf]
    %v277 = vld [vmem:[%s3 + $0x40] sm:$0xf]
    %v278 = vld [vmem:[%s3 + $0x44] sm:$0xf]
    %v279 = vld [vmem:[%s3 + $0x48] sm:$0xf]
    %v280 = vld [vmem:[%s3 + $0x4c] sm:$0xf]
    %v281 = vld [vmem:[%s3 + $0x50] sm:$0xf]
    %v282 = vld [vmem:[%s3 + $0x54] sm:$0xf]
    %v283 = vld [vmem:[%s3 + $0x58] sm:$0xf]
    %v284 = vld [vmem:[%s3 + $0x5c] sm:$0xf]
    %v285 = vld [vmem:[%s3 + $0x60] sm:$0xf]
    %v286 = vld [vmem:[%s3 + $0x64] sm:$0xf]
    %v287 = vld [vmem:[%s3 + $0x68] sm:$0xf]
    %v288 = vld [vmem:[%s3 + $0x6c] sm:$0xf]
    %v289 = vld [vmem:[%s3 + $0x70] sm:$0xf]
    %v290 = vld [vmem:[%s3 + $0x74] sm:$0xf]
    %v291 = vld [vmem:[%s3 + $0x78] sm:$0xf]
    %v292 = vld [vmem:[%s3 + $0x7c] sm:$0xf]
    %v293 = vld [vmem:[%s3 + $0x80] sm:$0xf]
    %v294 = vld [vmem:[%s3 + $0x84] sm:$0xf]
    %v295 = vld [vmem:[%s3 + $0x88] sm:$0xf]
    %v296 = vld [vmem:[%s3 + $0x8c] sm:$0xf]
    %v297 = vld [vmem:[%s3 + $0x90] sm:$0xf]
    %v298 = vld [vmem:[%s3 + $0x94] sm:$0xf]
    %v299 = vld [vmem:[%s3 + $0x98] sm:$0xf]
    %v300 = vld [vmem:[%s3 + $0x9c] sm:$0xf]
    %v301 = vld [vmem:[%s3 + $0xa0] sm:$0xf]
    %v302 = vld [vmem:[%s3 + $0xa4] sm:$0xf]
    %v303 = vld [vmem:[%s3 + $0xa8] sm:$0xf]
    %v304 = vld [vmem:[%s3 + $0xac] sm:$0xf]
    %v305 = vld [vmem:[%s3 + $0xb0] sm:$0xf]
    %v306 = vld [vmem:[%s3 + $0xb4] sm:$0xf]
    %v307 = vld [vmem:[%s3 + $0xb8] sm:$0xf]
    %v308 = vld [vmem:[%s3 + $0xbc] sm:$0xf]
    %v309 = vld [vmem:[%s3 + $0xc0] sm:$0xf]
    %v310 = vld [vmem:[%s3 + $0xc4] sm:$0xf]
    %v311 = vld [vmem:[%s3 + $0xc8] sm:$0xf]
    %v312 = vld [vmem:[%s3 + $0xcc] sm:$0xf]
    %v313 = vld [vmem:[%s3 + $0xd0] sm:$0xf]
    %v314 = vld [vmem:[%s3 + $0xd4] sm:$0xf]
    %v315 = vld [vmem:[%s3 + $0xd8] sm:$0xf]
    %v316 = vld [vmem:[%s3 + $0xdc] sm:$0xf]
    %v317 = vld [vmem:[%s3 + $0xe0] sm:$0xf]
    %v318 = vld [vmem:[%s3 + $0xe4] sm:$0xf]
    %v319 = vld [vmem:[%s3 + $0xe8] sm:$0xf]
    %v320 = vld [vmem:[%s3 + $0xec] sm:$0xf]
    %v321 = vld [vmem:[%s3 + $0xf0] sm:$0xf]
    %v322 = vld [vmem:[%s3 + $0xf4] sm:$0xf]
    %v323 = vld [vmem:[%s3 + $0xf8] sm:$0xf]
    %v324 = vld [vmem:[%s3 + $0xfc] sm:$0xf]
    %v325 = vld [vmem:[%s4] sm:$0x1]
    %v327 = vlaneseq
    %v328 = vshrl.u32 %v327, 7
    %v329 = vsub.s32 0, %v328
    %v330 = vrot.slane %v325, %v329
    %v396 = vunpack.c.l.b16 %v261
    %v397 = vunpack.c.l.b16 %v262
    %v398 = vunpack.c.l.b16 %v263
    %v399 = vunpack.c.l.b16 %v264
    %v400 = vunpack.c.l.b16 %v265
    %v401 = vunpack.c.l.b16 %v266
    %v402 = vunpack.c.l.b16 %v267
    %v403 = vunpack.c.l.b16 %v268
    %v404 = vunpack.c.l.b16 %v269
    %v405 = vunpack.c.l.b16 %v270
    %v406 = vunpack.c.l.b16 %v271
    %v407 = vunpack.c.l.b16 %v272
    %v408 = vunpack.c.l.b16 %v273
    %v409 = vunpack.c.l.b16 %v274
    %v410 = vunpack.c.l.b16 %v275
    %v411 = vunpack.c.l.b16 %v276
    %v412 = vunpack.c.l.b16 %v277
    %v413 = vunpack.c.l.b16 %v278
    %v414 = vunpack.c.l.b16 %v279
    %v415 = vunpack.c.l.b16 %v280
    %v416 = vunpack.c.l.b16 %v281
    %v417 = vunpack.c.l.b16 %v282
    %v418 = vunpack.c.l.b16 %v283
    %v419 = vunpack.c.l.b16 %v284
    %v420 = vunpack.c.l.b16 %v285
    %v421 = vunpack.c.l.b16 %v286
    %v422 = vunpack.c.l.b16 %v287
    %v423 = vunpack.c.l.b16 %v288
    %v424 = vunpack.c.l.b16 %v289
    %v425 = vunpack.c.l.b16 %v290
    %v426 = vunpack.c.l.b16 %v291
    %v427 = vunpack.c.l.b16 %v292
    %v428 = vunpack.c.l.b16 %v293
    %v429 = vunpack.c.l.b16 %v294
    %v430 = vunpack.c.l.b16 %v295
    %v431 = vunpack.c.l.b16 %v296
    %v432 = vunpack.c.l.b16 %v297
    %v433 = vunpack.c.l.b16 %v298
    %v434 = vunpack.c.l.b16 %v299
    %v435 = vunpack.c.l.b16 %v300
    %v436 = vunpack.c.l.b16 %v301
    %v437 = vunpack.c.l.b16 %v302
    %v438 = vunpack.c.l.b16 %v303
    %v439 = vunpack.c.l.b16 %v304
    %v440 = vunpack.c.l.b16 %v305
    %v441 = vunpack.c.l.b16 %v306
    %v442 = vunpack.c.l.b16 %v307
    %v443 = vunpack.c.l.b16 %v308
    %v444 = vunpack.c.l.b16 %v309
    %v445 = vunpack.c.l.b16 %v310
    %v446 = vunpack.c.l.b16 %v311
    %v447 = vunpack.c.l.b16 %v312
    %v448 = vunpack.c.l.b16 %v313
    %v449 = vunpack.c.l.b16 %v314
    %v450 = vunpack.c.l.b16 %v315
    %v451 = vunpack.c.l.b16 %v316
    %v452 = vunpack.c.l.b16 %v317
    %v453 = vunpack.c.l.b16 %v318
    %v454 = vunpack.c.l.b16 %v319
    %v455 = vunpack.c.l.b16 %v320
    %v456 = vunpack.c.l.b16 %v321
    %v457 = vunpack.c.l.b16 %v322
    %v458 = vunpack.c.l.b16 %v323
    %v459 = vunpack.c.l.b16 %v324
    %v460 = vpack.c.b16 %v397, %v396
    %v461 = vpack.c.b16 %v399, %v398
    %v462 = vpack.c.b16 %v401, %v400
    %v463 = vpack.c.b16 %v403, %v402
    %v464 = vpack.c.b16 %v405, %v404
    %v465 = vpack.c.b16 %v407, %v406
    %v466 = vpack.c.b16 %v409, %v408
    %v467 = vpack.c.b16 %v411, %v410
    %v468 = vpack.c.b16 %v413, %v412
    %v469 = vpack.c.b16 %v415, %v414
    %v470 = vpack.c.b16 %v417, %v416
    %v471 = vpack.c.b16 %v419, %v418
    %v472 = vpack.c.b16 %v421, %v420
    %v473 = vpack.c.b16 %v423, %v422
    %v474 = vpack.c.b16 %v425, %v424
    %v475 = vpack.c.b16 %v427, %v426
    %v476 = vpack.c.b16 %v429, %v428
    %v477 = vpack.c.b16 %v431, %v430
    %v478 = vpack.c.b16 %v433, %v432
    %v479 = vpack.c.b16 %v435, %v434
    %v480 = vpack.c.b16 %v437, %v436
    %v481 = vpack.c.b16 %v439, %v438
    %v482 = vpack.c.b16 %v441, %v440
    %v483 = vpack.c.b16 %v443, %v442
    %v484 = vpack.c.b16 %v445, %v444
    %v485 = vpack.c.b16 %v447, %v446
    %v486 = vpack.c.b16 %v449, %v448
    %v487 = vpack.c.b16 %v451, %v450
    %v488 = vpack.c.b16 %v453, %v452
    %v489 = vpack.c.b16 %v455, %v454
    %v490 = vpack.c.b16 %v457, %v456
    %v491 = vpack.c.b16 %v459, %v458
    %524 = vmatprep.subr.bf16.mxu0 0
    %525 = vmatpush1.bf16.msra.mxu0 %v467
    %526 = vmatprep.subr.bf16.mxu0 0
    %527 = vmatpush1.bf16.msra.mxu0 %v466
    %528 = vmatprep.subr.bf16.mxu0 0
    %529 = vmatpush1.bf16.msra.mxu0 %v465
    %530 = vmatprep.subr.bf16.mxu0 0
    %531 = vmatpush1.bf16.msra.mxu0 %v464
    %532 = vmatprep.subr.bf16.mxu0 0
    %533 = vmatpush1.bf16.msra.mxu0 %v463
    %534 = vmatprep.subr.bf16.mxu0 0
    %535 = vmatpush1.bf16.msra.mxu0 %v462
    %536 = vmatprep.subr.bf16.mxu0 0
    %537 = vmatpush1.bf16.msra.mxu0 %v461
    %538 = vmatprep.subr.bf16.mxu0 0
    %539 = vmatpush1.bf16.msra.mxu0 %v460
    %540 = vmatprep.subr.bf16.mxu0 0
    %541 = vmatpush2.bf16.msra.mxu0 %v475
    %542 = vmatprep.subr.bf16.mxu0 0
    %543 = vmatpush2.bf16.msra.mxu0 %v474
    %544 = vmatprep.subr.bf16.mxu0 0
    %545 = vmatpush2.bf16.msra.mxu0 %v473
    %546 = vmatprep.subr.bf16.mxu0 0
    %547 = vmatpush2.bf16.msra.mxu0 %v472
    %548 = vmatprep.subr.bf16.mxu0 0
    %549 = vmatpush2.bf16.msra.mxu0 %v471
    %550 = vmatprep.subr.bf16.mxu0 0
    %551 = vmatpush2.bf16.msra.mxu0 %v470
    %552 = vmatprep.subr.bf16.mxu0 0
    %553 = vmatpush2.bf16.msra.mxu0 %v469
    %554 = vmatprep.subr.bf16.mxu0 0
    %555 = vmatpush2.bf16.msra.mxu0 %v468
    %556 = vmatprep.mubr.bf16.mxu0 %v258
    %557 = vmatmul.mubr.bf16.gmra.mxu0 %v257
    %v558 = vpop.f32.mrf.mxu0
    %v559 = vadd.f32 %v330, %v558
    %v560 = vpop.f32.mrf.mxu0
    %v561 = vpop.f32.mrf.mxu0
    %v562 = vadd.f32 %v330, %v561
    %v563 = vpop.f32.mrf.mxu0
    %564 = vdwg.mxu0
    %565 = vmatprep.subr.bf16.mxu0 0
    %566 = vmatpush1.bf16.msra.mxu0 %v483
    %567 = vmatprep.subr.bf16.mxu0 0
    %568 = vmatpush1.bf16.msra.mxu0 %v482
    %569 = vmatprep.subr.bf16.mxu0 0
    %570 = vmatpush1.bf16.msra.mxu0 %v481
    %571 = vmatprep.subr.bf16.mxu0 0
    %572 = vmatpush1.bf16.msra.mxu0 %v480
    %573 = vmatprep.subr.bf16.mxu0 0
    %574 = vmatpush1.bf16.msra.mxu0 %v479
    %575 = vmatprep.subr.bf16.mxu0 0
    %576 = vmatpush1.bf16.msra.mxu0 %v478
    %577 = vmatprep.subr.bf16.mxu0 0
    %578 = vmatpush1.bf16.msra.mxu0 %v477
    %579 = vmatprep.subr.bf16.mxu0 0
    %580 = vmatpush1.bf16.msra.mxu0 %v476
    %581 = vmatprep.subr.bf16.mxu0 0
    %582 = vmatpush2.bf16.msra.mxu0 %v491
    %583 = vmatprep.subr.bf16.mxu0 0
    %584 = vmatpush2.bf16.msra.mxu0 %v490
    %585 = vmatprep.subr.bf16.mxu0 0
    %586 = vmatpush2.bf16.msra.mxu0 %v489
    %587 = vmatprep.subr.bf16.mxu0 0
    %588 = vmatpush2.bf16.msra.mxu0 %v488
    %589 = vmatprep.subr.bf16.mxu0 0
    %590 = vmatpush2.bf16.msra.mxu0 %v487
    %591 = vmatprep.subr.bf16.mxu0 0
    %592 = vmatpush2.bf16.msra.mxu0 %v486
    %593 = vmatprep.subr.bf16.mxu0 0
    %594 = vmatpush2.bf16.msra.mxu0 %v485
    %595 = vmatprep.subr.bf16.mxu0 0
    %596 = vmatpush2.bf16.msra.mxu0 %v484
    %597 = vmatprep.mubr.bf16.mxu0 %v260
    %598 = vmatmul.mubr.bf16.gmra.mxu0 %v259
    %v599 = vpop.f32.mrf.mxu0
    %v600 = vadd.f32 %v559, %v599
    %v601 = vpop.f32.mrf.mxu0
    %v602 = vpop.f32.mrf.mxu0
    %v603 = vadd.f32 %v562, %v602
    %v604 = vpop.f32.mrf.mxu0
    %605 = vdwg.mxu0
    %606 = vst.msk [vmem:[#allocation2] sm:$0xff] %vm143, %v600
    %607 = vst.msk [vmem:[#allocation2 + $0x8] sm:$0xff] %vm143, %v603
    // Predicated region
    $region22: #{tpu_custom_call.1} parent=1 // pred_check
      _
    $region23: #{tpu_custom_call.1} parent=1 // pred_check_branch
      %609 = sbr.rel (0) target = $region25
    $region24: #{tpu_custom_call.1} parent=1 // pred_region
      %s611 = ssub.s32 256, 256
      %612 = vsyncadd [#allocation3], %s611
      %s613 = sshll.u32 [#allocation2], 4
      %s614 = int_to_ptr.vmem [resolvable:$true] %s613
      %619 = dma.vmem_to_hbm [thread:$0]  %s614, 256, %s5, [#allocation3], 128, 128, 8
    $region25: #{tpu_custom_call.1} parent=1 // pred_fallthru
      _
    // Predicated region
    $region26: #{tpu_custom_call.1} parent=1 // pred_check
      _
    $region27: #{tpu_custom_call.1} parent=1 // pred_check_branch
      %621 = sbr.rel (0) target = $region29
    $region28: #{tpu_custom_call.1} parent=1 // pred_region
      %622 = dma.done [#allocation3], 256
    $region29: #{tpu_custom_call.1} parent=1 // pred_fallthru
      _
    %623 = vsyncpa [#allocation3], 1

</llo_original>
